<compile_context>
chip_gen: v7x
topology: tpu7x:2x2x1
jax: 0.10.0
libtpu: 0.0.40
codegen_flags: <defaults>
</compile_context>

<pallas_src>
import jax
import jax.numpy as jnp
from jax.experimental import pallas as pl
from jax.experimental.pallas import tpu as pltpu


def _make_norm_kernel(eps: float):
    def norm_kernel(x_ref, alpha_ref, bias_ref, o_ref):
        x = x_ref[...].astype(jnp.float32)                    # (Bt, d, TL)
        d = x.shape[-2]
        # mean over the d axis (sublane axis), keepdim
        avg = jnp.mean(x, axis=-2, keepdims=True)             # (Bt, 1, TL)
        diff = x - avg                                        # (Bt, d, TL)
        # unbiased variance (Bessel correction — matches torch.std default)
        var = jnp.sum(diff * diff, axis=-2, keepdims=True) / (d - 1)
        std = jnp.sqrt(var) + eps                             # eps on std (torch)
        # exact division (HBM-bound kernel -> divide is free); same eval order
        # as torch: alpha * (x - avg) / std + bias
        out = alpha_ref[...] * diff / std + bias_ref[...]
        o_ref[...] = out.astype(o_ref.dtype)

    return norm_kernel


def _pick_tiles(B: int, d: int, L: int, itemsize: int,
                target_bytes: int = 4 << 20):
    """Choose (Bt, TL).

    TL: lane tile, multiple of 128 (masked partial last tile via cdiv grid),
        unless L <= 128 in which case the full-extent block is used.
    Bt: batches per step so one input tile stays around `target_bytes`.
    Both are capped so the grid keeps >= 2 steps when the problem allows it
    (megacore / 2-TC sharding on v7x).
    """
    if L <= 128:
        TL = L  # full-extent block is always legal
    else:
        budget_tl = max(128, (target_bytes // max(d * itemsize, 1)) // 128 * 128)
        TL = min((L // 128) * 128, 2048, budget_tl)

    tile_bytes = d * TL * itemsize
    Bt = max(1, min(B, target_bytes // max(tile_bytes, 1)))

    def steps(bt, tl):
        return pl.cdiv(B, bt) * pl.cdiv(L, tl)

    # Keep at least 2 grid steps along a parallel axis when possible.
    while steps(Bt, TL) < 2 and Bt > 1:
        Bt = max(1, Bt // 2)
    while steps(Bt, TL) < 2 and L > 128 and TL >= 256:
        TL = max(128, ((TL // 2) // 128) * 128)

    return Bt, TL


def norm_pallas(x, alpha, bias, eps: float = 1e-6):
    """x: (B, d, L), alpha/bias: (d, 1) -> (B, d, L), dtype preserved."""
    B, d, L = x.shape
    assert d >= 2, "unbiased std needs d >= 2 (torch.std with N-1 denominator)"
    itemsize = jnp.dtype(x.dtype).itemsize
    Bt, TL = _pick_tiles(B, d, L, itemsize)

    # Peak VMEM ~ double-buffered in + out + diff/temp slabs ~ 6-8x tile_bytes.
    tile_bytes = Bt * d * TL * itemsize
    vmem_limit = int(min(48 << 20, max(16 << 20, 8 * tile_bytes)))

    kernel = _make_norm_kernel(eps)
    return pl.pallas_call(
        kernel,
        out_shape=jax.ShapeDtypeStruct((B, d, L), x.dtype),
        grid_spec=pltpu.PrefetchScalarGridSpec(
            num_scalar_prefetch=0,
            grid=(pl.cdiv(B, Bt), pl.cdiv(L, TL)),
            in_specs=[
                pl.BlockSpec((Bt, d, TL), lambda b, l: (b, 0, l)),
                pl.BlockSpec((d, 1), lambda b, l: (0, 0)),
                pl.BlockSpec((d, 1), lambda b, l: (0, 0)),
            ],
            out_specs=pl.BlockSpec((Bt, d, TL), lambda b, l: (b, 0, l)),
        ),
        compiler_params=pltpu.CompilerParams(
            dimension_semantics=("parallel", "parallel"),
            vmem_limit_bytes=vmem_limit,
        ),
    )(x, alpha, bias)


def norm_ref(x, alpha, bias, eps: float = 1e-6):
    """Pure-JAX reference mirroring the PyTorch forward (unbiased std)."""
    xf = x.astype(jnp.float32)
    avg = jnp.mean(xf, axis=-2, keepdims=True)
    var = jnp.sum((xf - avg) ** 2, axis=-2, keepdims=True) / (x.shape[-2] - 1)
    std = jnp.sqrt(var) + eps
    return (alpha * (xf - avg) / std + bias).astype(x.dtype)


if __name__ == "__main__":
    key = jax.random.PRNGKey(0)

    # Shapes consistent with the module's forward (B, d, L); small test cases,
    # including a ragged L to exercise the masked partial lane tile.
    for (B, d, L) in [(2, 32, 128), (4, 64, 1024), (2, 48, 200)]:
        kx, ka, kb, key = jax.random.split(key, 4)
        x = jax.random.normal(kx, (B, d, L), dtype=jnp.float32)
        # __init__ for axis=-2: alpha, bias = torch.randn((d, 1)) — deterministic here
        alpha = jax.random.normal(ka, (d, 1), dtype=jnp.float32)
        bias = jax.random.normal(kb, (d, 1), dtype=jnp.float32)

        out = norm_pallas(x, alpha, bias)
        out = jax.block_until_ready(out)

        ref = norm_ref(x, alpha, bias)
        assert out.shape == (B, d, L)
        assert jnp.allclose(out, ref, atol=1e-5, rtol=1e-5), (
            float(jnp.max(jnp.abs(out - ref)))
        )

    print("KERNEL_OK")
</pallas_src>

<mosaic_0001>
module attributes {stable_mosaic.version = 11 : i64} {
  func.func @norm_kernel(%arg0: i32, %arg1: i32, %arg2: memref<1x32x128xf32, #tpu.memory_space<vmem>>, %arg3: memref<32x1xf32, #tpu.memory_space<vmem>>, %arg4: memref<32x1xf32, #tpu.memory_space<vmem>>, %arg5: memref<1x32x128xf32, #tpu.memory_space<vmem>>) attributes {dimension_semantics = [#tpu.dimension_semantics<parallel>, #tpu.dimension_semantics<parallel>], iteration_bounds = array<i64: 2, 1>, scalar_prefetch = 0 : i64, scratch_operands = 0 : i64, tpu.core_type = #tpu.core_type<tc>, window_params = [{transform_indices = @transform_0, window_bounds = array<i64: 1, 32, 128>}, {pipeline_mode = #tpu.pipeline_mode<synchronous>, transform_indices = @transform_1, window_bounds = array<i64: 32, 1>}, {pipeline_mode = #tpu.pipeline_mode<synchronous>, transform_indices = @transform_2, window_bounds = array<i64: 32, 1>}, {transform_indices = @transform_3, window_bounds = array<i64: 1, 32, 128>}]} {
    %c0 = arith.constant 0 : index
    %c0_0 = arith.constant 0 : index
    %c0_1 = arith.constant 0 : index
    %0 = vector.load %arg2[%c0, %c0_0, %c0_1] : memref<1x32x128xf32, #tpu.memory_space<vmem>>, vector<1x32x128xf32>
    %cst = arith.constant dense<0.000000e+00> : vector<1x128xf32>
    %1 = vector.multi_reduction <add>, %0, %cst [1] : vector<1x32x128xf32> to vector<1x128xf32>
    %2 = vector.shape_cast %1 : vector<1x128xf32> to vector<1x1x128xf32>
    %cst_2 = arith.constant 3.200000e+01 : f32
    %3 = vector.broadcast %cst_2 : f32 to vector<1x1x128xf32>
    %4 = arith.divf %2, %3 : vector<1x1x128xf32>
    %5 = vector.broadcast %4 : vector<1x1x128xf32> to vector<1x32x128xf32>
    %6 = arith.subf %0, %5 : vector<1x32x128xf32>
    %7 = arith.mulf %6, %6 : vector<1x32x128xf32>
    %cst_3 = arith.constant dense<0.000000e+00> : vector<1x128xf32>
    %8 = vector.multi_reduction <add>, %7, %cst_3 [1] : vector<1x32x128xf32> to vector<1x128xf32>
    %9 = vector.shape_cast %8 : vector<1x128xf32> to vector<1x1x128xf32>
    %cst_4 = arith.constant 3.100000e+01 : f32
    %10 = vector.broadcast %cst_4 : f32 to vector<1x1x128xf32>
    %11 = arith.divf %9, %10 : vector<1x1x128xf32>
    %12 = math.sqrt %11 : vector<1x1x128xf32>
    %cst_5 = arith.constant 9.99999997E-7 : f32
    %13 = vector.broadcast %cst_5 : f32 to vector<1x1x128xf32>
    %14 = arith.addf %12, %13 : vector<1x1x128xf32>
    %c0_6 = arith.constant 0 : index
    %c0_7 = arith.constant 0 : index
    %15 = vector.load %arg3[%c0_6, %c0_7] : memref<32x1xf32, #tpu.memory_space<vmem>>, vector<32x1xf32>
    %16 = vector.shape_cast %15 : vector<32x1xf32> to vector<1x32x1xf32>
    %17 = vector.broadcast %16 : vector<1x32x1xf32> to vector<1x32x128xf32>
    %18 = arith.mulf %17, %6 : vector<1x32x128xf32>
    %19 = vector.broadcast %14 : vector<1x1x128xf32> to vector<1x32x128xf32>
    %20 = arith.divf %18, %19 : vector<1x32x128xf32>
    %c0_8 = arith.constant 0 : index
    %c0_9 = arith.constant 0 : index
    %21 = vector.load %arg4[%c0_8, %c0_9] : memref<32x1xf32, #tpu.memory_space<vmem>>, vector<32x1xf32>
    %22 = vector.shape_cast %21 : vector<32x1xf32> to vector<1x32x1xf32>
    %23 = vector.broadcast %22 : vector<1x32x1xf32> to vector<1x32x128xf32>
    %24 = arith.addf %20, %23 : vector<1x32x128xf32>
    %c0_10 = arith.constant 0 : index
    %c0_11 = arith.constant 0 : index
    %c0_12 = arith.constant 0 : index
    %25 = vector.load %arg5[%c0_10, %c0_11, %c0_12] : memref<1x32x128xf32, #tpu.memory_space<vmem>>, vector<1x32x128xf32>
    tpu.vector_store %arg5[%c0_10, %c0_11, %c0_12], %24 {strides = array<i32>} : memref<1x32x128xf32, #tpu.memory_space<vmem>>, vector<1x32x128xf32>,
    return
  }
  func.func @transform_0(%arg0: i32, %arg1: i32) -> (i32, i32, i32) {
    %c0_i32 = arith.constant 0 : i32
    %c0_i32_0 = arith.constant 0 : i32
    return %arg0, %c0_i32, %arg1 : i32, i32, i32
  }
  func.func @transform_1(%arg0: i32, %arg1: i32) -> (i32, i32) {
    %c0_i32 = arith.constant 0 : i32
    %c0_i32_0 = arith.constant 0 : i32
    %c0_i32_1 = arith.constant 0 : i32
    return %c0_i32, %c0_i32_0 : i32, i32
  }
  func.func @transform_2(%arg0: i32, %arg1: i32) -> (i32, i32) {
    %c0_i32 = arith.constant 0 : i32
    %c0_i32_0 = arith.constant 0 : i32
    %c0_i32_1 = arith.constant 0 : i32
    return %c0_i32, %c0_i32_0 : i32, i32
  }
  func.func @transform_3(%arg0: i32, %arg1: i32) -> (i32, i32, i32) {
    %c0_i32 = arith.constant 0 : i32
    %c0_i32_0 = arith.constant 0 : i32
    return %arg0, %c0_i32, %arg1 : i32, i32, i32
  }
}

</mosaic_0001>

<llo_original>
// kernel: tpu_custom_call.1
$region0: #{tpu_custom_call.1}
  #allocation0 [shape = 'u32[]', space=smem, size = 0x4, offset = 0x4, fixed_abs, tag = 'smem constant byte address 0x4 - core index']
  #allocation1 [shape = 'u32[144,128]{1,0:T(1,128)}', space=vmem, size = 0x12000, scoped, tag = 'internal scratch']
  %s0 = inlined_call_operand.vmem [shape: f32[2,32,128], index: 0, kind: input, shape index: {}]
  %s1 = inlined_call_operand.vmem [shape: f32[32,1], index: 1, kind: input, shape index: {}]
  %s2 = inlined_call_operand.vmem [shape: f32[32,1], index: 2, kind: input, shape index: {}]
  %s3 = inlined_call_operand.hbm [shape: f32[2,32,128], index: 3, kind: output, shape index: {}]
  %s4 = sld [smem:[#allocation0]]
  $region45: #{tpu_custom_call.1} parent=0
    _
  %s6 = ssub.s32 1, %s4
  %s7 = scalar_select 0, %s6, %s4
  $region1: #{tpu_custom_call.1} parent=0
    #allocation2 [shape = 'u8[32768]{0}', space=vmem, size = 0x8000, scoped, tag = 'output window, operand 0']
    #allocation3 [shape = 's32[2]{0}', space=sflag, size = 0x8, scoped, tag = 'scoped memory for tpu_custom_call.1']
    %8 = vsyncpa [#allocation3], 0
    %s9 = scalar_lea.sflag [#allocation3], 1
    %10 = vsyncpa %s9, 0
    loop: start=0, step=1, limit=4
    $region2: #{tpu_custom_call.1} parent=1 // loop_pre_header
      _
    $region3: #{tpu_custom_call.1} parent=1 // loop_header
      %s12 = sphi 0, %s16
      %p13 = scmp.ge.s32.totalorder %s12, 4
      %s19 = sphi 0, %s31
      %s20 = sphi 0, %s27
      %s21 = sphi 0, %s19
      %s22 = sphi 0, %s20
      %s23 = sphi 0, %s21
      %s24 = sphi 0, %s22
      %s36 = sphi 0, %s38
      %s39 = sphi 0, %s36
      %s40 = sphi 0, %s39
      %s56 = sphi 0, %s40
      %s60 = sphi 0, %s60
      %s62 = sphi 0, %s60
      %s63 = sphi 0, %s62
      %s77 = sphi 0, %s63
      %s81 = sphi 0, %s81
      %s83 = sphi 0, %s81
      %s84 = sphi 0, %s83
      %s98 = sphi 0, %s84
      %s106 = sphi 0, %s108
      %s109 = sphi 0, %s106
      %s110 = sphi 0, %s109
      %s126 = sphi 0, %s110
    $region4: #{tpu_custom_call.1} parent=1 // loop_header_branch
      %15 = sbr.rel (%p13) target = $region8
    $region5: #{tpu_custom_call.1} parent=1 // loop_body
      %s17 = ssub.s32 %s12, 1
      %s18 = ssub.s32 %s12, 2
      %s25 = sadd.s32 1, %s20
      %p26 = scmp.ge.s32.totalorder %s25, 1
      %s27 = scalar_select %p26, 0, %s25
      %s28 = sadd.s32 1, %s19
      %s29 = scalar_select %p26, %s28, %s19
      %p30 = scmp.ge.s32.totalorder %s29, 2
      %s31 = scalar_select %p30, 0, %s29
      %s32 = ssub.s32 %s19, %s31
      %s33 = ssub.s32 %s20, %s27
      %s34 = sor.u32 %s32, %s33
      %p35 = scmp.eq.s32.totalorder %s34, 0
      %s37 = sadd.s32 %s36, 1
      %s38 = scalar_select %p35, %s36, %s37
      %p41 = pneg %p35
      %p42 = scmp.eq.s32.totalorder %s12, 1
      %p43 = por %p41, %p42
      %p44 = scmp.ne.s32.totalorder %s36, %s39
      %p45 = scmp.eq.s32.totalorder %s12, 0
      %p46 = por %p44, %p45
      %p47 = scmp.ne.s32.totalorder %s36, %s39
      %p48 = scmp.eq.s32.totalorder %s17, 1
      %p49 = por %p47, %p48
      %p50 = scmp.ne.s32.totalorder %s39, %s40
      %p51 = scmp.eq.s32.totalorder %s17, 0
      %p52 = por %p50, %p51
      %p53 = scmp.ne.s32.totalorder %s39, %s40
      %p54 = scmp.eq.s32.totalorder %s18, 1
      %p55 = por %p53, %p54
      %p57 = scmp.ne.s32.totalorder %s40, %s56
      %p58 = scmp.eq.s32.totalorder %s18, 0
      %p59 = por %p57, %p58
      %s61 = sadd.s32 %s60, 1
      %p64 = scmp.eq.s32.totalorder %s12, 1
      %p65 = scmp.ne.s32.totalorder %s60, %s62
      %p66 = scmp.eq.s32.totalorder %s12, 0
      %p67 = por %p65, %p66
      %p68 = scmp.ne.s32.totalorder %s60, %s62
      %p69 = scmp.eq.s32.totalorder %s17, 1
      %p70 = por %p68, %p69
      %p71 = scmp.ne.s32.totalorder %s62, %s63
      %p72 = scmp.eq.s32.totalorder %s17, 0
      %p73 = por %p71, %p72
      %p74 = scmp.ne.s32.totalorder %s62, %s63
      %p75 = scmp.eq.s32.totalorder %s18, 1
      %p76 = por %p74, %p75
      %p78 = scmp.ne.s32.totalorder %s63, %s77
      %p79 = scmp.eq.s32.totalorder %s18, 0
      %p80 = por %p78, %p79
      %s82 = sadd.s32 %s81, 1
      %p85 = scmp.eq.s32.totalorder %s12, 1
      %p86 = scmp.ne.s32.totalorder %s81, %s83
      %p87 = scmp.eq.s32.totalorder %s12, 0
      %p88 = por %p86, %p87
      %p89 = scmp.ne.s32.totalorder %s81, %s83
      %p90 = scmp.eq.s32.totalorder %s17, 1
      %p91 = por %p89, %p90
      %p92 = scmp.ne.s32.totalorder %s83, %s84
      %p93 = scmp.eq.s32.totalorder %s17, 0
      %p94 = por %p92, %p93
      %p95 = scmp.ne.s32.totalorder %s83, %s84
      %p96 = scmp.eq.s32.totalorder %s18, 1
      %p97 = por %p95, %p96
      %p99 = scmp.ne.s32.totalorder %s84, %s98
      %p100 = scmp.eq.s32.totalorder %s18, 0
      %p101 = por %p99, %p100
      %s102 = ssub.s32 %s19, %s31
      %s103 = ssub.s32 %s20, %s27
      %s104 = sor.u32 %s102, %s103
      %p105 = scmp.eq.s32.totalorder %s104, 0
      %s107 = sadd.s32 %s106, 1
      %s108 = scalar_select %p105, %s106, %s107
      %p111 = pneg %p105
      %p112 = scmp.eq.s32.totalorder %s12, 1
      %p113 = por %p111, %p112
      %p114 = scmp.ne.s32.totalorder %s106, %s109
      %p115 = scmp.eq.s32.totalorder %s12, 0
      %p116 = por %p114, %p115
      %p117 = scmp.ne.s32.totalorder %s106, %s109
      %p118 = scmp.eq.s32.totalorder %s17, 1
      %p119 = por %p117, %p118
      %p120 = scmp.ne.s32.totalorder %s109, %s110
      %p121 = scmp.eq.s32.totalorder %s17, 0
      %p122 = por %p120, %p121
      %p123 = scmp.ne.s32.totalorder %s109, %s110
      %p124 = scmp.eq.s32.totalorder %s18, 1
      %p125 = por %p123, %p124
      %p127 = scmp.ne.s32.totalorder %s110, %s126
      %p128 = scmp.eq.s32.totalorder %s18, 0
      %p129 = por %p127, %p128
      %p130 = scmp.le.s32.totalorder 1, %s12
      %p131 = scmp.lt.s32.totalorder %s12, 3
      %p132 = pnand %p130, %p131
      %p133 = pneg %p132
      // Predicated region
      $region9: #{tpu_custom_call.1} parent=5 // pred_check
        _
      $region10: #{tpu_custom_call.1} parent=5 // pred_check_branch
        %135 = sbr.rel (%p132) target = $region12
      $region11: #{tpu_custom_call.1} parent=5 // pred_region
        %s136 = ssub.s32 %s12, 1
        // Predicated region
        $region13: #{tpu_custom_call.1} parent=11 // pred_check
          %p137 = pneg %p73
        $region14: #{tpu_custom_call.1} parent=11 // pred_check_branch
          %139 = sbr.rel (%p137) target = $region16
        $region15: #{tpu_custom_call.1} parent=11 // pred_region
          _
        $region16: #{tpu_custom_call.1} parent=11 // pred_fallthru
          _
        // Predicated region
        $region17: #{tpu_custom_call.1} parent=11 // pred_check
          %p140 = pneg %p94
        $region18: #{tpu_custom_call.1} parent=11 // pred_check_branch
          %142 = sbr.rel (%p140) target = $region20
        $region19: #{tpu_custom_call.1} parent=11 // pred_region
          _
        $region20: #{tpu_custom_call.1} parent=11 // pred_fallthru
          _
      $region12: #{tpu_custom_call.1} parent=5 // pred_fallthru
        _
      %p143 = scmp.lt.s32.totalorder %s12, 2
      // Predicated region
      $region21: #{tpu_custom_call.1} parent=5 // pred_check
        %p144 = pneg %p143
      $region22: #{tpu_custom_call.1} parent=5 // pred_check_branch
        %146 = sbr.rel (%p144) target = $region24
      $region23: #{tpu_custom_call.1} parent=5 // pred_region
        // Predicated region
        $region25: #{tpu_custom_call.1} parent=23 // pred_check
          %p147 = pneg %p46
        $region26: #{tpu_custom_call.1} parent=23 // pred_check_branch
          %149 = sbr.rel (%p147) target = $region28
        $region27: #{tpu_custom_call.1} parent=23 // pred_region
          %p150 = scmp.lt.s32.totalorder %s19, 1
          %s151 = scalar_select %p150, %s19, 1
          %p152 = scmp.lt.s32.totalorder %s20, 0
          %s153 = scalar_select %p152, %s20, 0
          %s154 = smul.addr %s151, 4
          %s155 = sadd.s32 %s153, %s154
          %s156 = smul.addr %s155, 8
          %s157 = scalar_lea.vmem %s0, %s156
        $region28: #{tpu_custom_call.1} parent=23 // pred_fallthru
          _
      $region24: #{tpu_custom_call.1} parent=5 // pred_fallthru
        _
      %p158 = scmp.le.s32.totalorder 1, %s12
      %p159 = scmp.lt.s32.totalorder %s12, 3
      %p160 = pnand %p158, %p159
      %p161 = pneg %p160
      // Predicated region
      $region29: #{tpu_custom_call.1} parent=5 // pred_check
        _
      $region30: #{tpu_custom_call.1} parent=5 // pred_check_branch
        %163 = sbr.rel (%p160) target = $region32
      $region31: #{tpu_custom_call.1} parent=5 // pred_region
        %s164 = ssub.s32 %s12, 1
        %p165 = scmp.lt.s32.totalorder %s21, 1
        %s166 = scalar_select %p165, %s21, 1
        %p167 = scmp.lt.s32.totalorder %s22, 0
        %s168 = scalar_select %p167, %s22, 0
        %s169 = smul.addr %s166, 4
        %s170 = sadd.s32 %s168, %s169
        %s171 = smul.addr %s170, 8
        %s172 = scalar_lea.vmem %s0, %s171
        %p173 = pneg %p52
        %p174 = pneg %p49
        %p175 = pneg %p73
        %p176 = pneg %p70
        %p177 = pneg %p94
        %p178 = pneg %p91
        %p179 = pneg %p122
        %p180 = pneg %p119
        %s181 = sand.u32 %s109, 1
        %s182 = scalar_lea.sflag [#allocation3], %s181
        %s183 = sand.u32 %s109, 1
        %s184 = smul.addr %s183, 32
        %s185 = scalar_lea.vmem [#allocation2], %s184
        %p186 = scmp.lt.s32.totalorder %s21, 1
        %s187 = scalar_select %p186, %s21, 1
        %p188 = scmp.lt.s32.totalorder %s22, 0
        %s189 = scalar_select %p188, %s22, 0
        %s190 = smul.addr %s187, 4
        %s191 = sadd.s32 %s189, %s190
        %s192 = smul.addr %s191, 8
        %s193 = scalar_lea.vmem %s0, %s192
        %v194 = vld [vmem:[%s193] sm:$0xff]
        %v195 = vld [vmem:[%s193 + $0x8] sm:$0xff]
        %v196 = vld [vmem:[%s193 + $0x10] sm:$0xff]
        %v197 = vld [vmem:[%s193 + $0x18] sm:$0xff]
        %v198 = vadd.f32 %v194, %v195
        %v199 = vadd.f32 %v198, %v196
        %v200 = vadd.f32 %v199, %v197
        %v201 = vrot.slane %v200, 4
        %v202 = vadd.f32 %v200, %v201
        %v203 = vrot.slane %v202, 2
        %v204 = vadd.f32 %v202, %v203
        %v205 = vrot.slane %v204, 1
        %v206 = vadd.f32 %v204, %v205
        %v207 = vrcp.pop 32.0
        %v208 = vmul.f32 %v206, %v207
        %v209 = vsub.f32 %v194, %v208
        %v210 = vsub.f32 %v195, %v208
        %v211 = vsub.f32 %v196, %v208
        %v212 = vsub.f32 %v197, %v208
        %v213 = vmul.f32 %v209, %v209
        %v214 = vmul.f32 %v210, %v210
        %v215 = vmul.f32 %v211, %v211
        %v216 = vmul.f32 %v212, %v212
        %v217 = vadd.f32 %v213, %v214
        %v218 = vadd.f32 %v217, %v215
        %v219 = vadd.f32 %v218, %v216
        %v220 = vrot.slane %v219, 4
        %v221 = vadd.f32 %v219, %v220
        %v222 = vrot.slane %v221, 2
        %v223 = vadd.f32 %v221, %v222
        %v224 = vrot.slane %v223, 1
        %v225 = vadd.f32 %v223, %v224
        %v226 = vrcp.pop 31.0
        %v227 = vmul.f32 %v225, %v226
        %v228 = vrsqrt.pop %v227
        %v229 = vmul.f32 %v227, %v228
        %vm230 = vcmp.eq.f32.partialorder %v227, inf
        %v231 = vsel %vm230, %v227, %v229
        %vm232 = vcmp.eq.f32.partialorder %v227, 0.0
        %v233 = vand.u32 %v227, 2147483648
        %v234 = vsel %vm232, %v233, %v231
        %v235 = vadd.f32 %v234, 1e-06
        %v236 = vld [vmem:[%s1] sm:$0xff]
        %v237 = vld [vmem:[%s1 + $0x8] sm:$0xff]
        %v238 = vld [vmem:[%s1 + $0x10] sm:$0xff]
        %v239 = vld [vmem:[%s1 + $0x18] sm:$0xff]
        %241 = vset.pattern.permute.xlu0 0
        %242 = vperm.xlu0 %241, %v236
        %v243 = vpop.permute.xlu0 %242
        %246 = vset.pattern.permute.xlu0 0
        %247 = vperm.xlu0 %246, %v237
        %v248 = vpop.permute.xlu0 %247
        %251 = vset.pattern.permute.xlu0 0
        %252 = vperm.xlu0 %251, %v238
        %v253 = vpop.permute.xlu0 %252
        %256 = vset.pattern.permute.xlu0 0
        %257 = vperm.xlu0 %256, %v239
        %v258 = vpop.permute.xlu0 %257
        %v260 = vmul.f32 %v243, %v209
        %v261 = vmul.f32 %v248, %v210
        %v262 = vmul.f32 %v253, %v211
        %v263 = vmul.f32 %v258, %v212
        %v264 = vrcp.pop %v235
        %v265 = vmul.f32 %v260, %v264
        %v266 = vmul.f32 %v261, %v264
        %v267 = vmul.f32 %v262, %v264
        %v268 = vmul.f32 %v263, %v264
        %v269 = vld [vmem:[%s2] sm:$0xff]
        %v270 = vld [vmem:[%s2 + $0x8] sm:$0xff]
        %v271 = vld [vmem:[%s2 + $0x10] sm:$0xff]
        %v272 = vld [vmem:[%s2 + $0x18] sm:$0xff]
        %274 = vset.pattern.permute.xlu0 0
        %275 = vperm.xlu0 %274, %v269
        %v276 = vpop.permute.xlu0 %275
        %279 = vset.pattern.permute.xlu0 0
        %280 = vperm.xlu0 %279, %v270
        %v281 = vpop.permute.xlu0 %280
        %284 = vset.pattern.permute.xlu0 0
        %285 = vperm.xlu0 %284, %v271
        %v286 = vpop.permute.xlu0 %285
        %289 = vset.pattern.permute.xlu0 0
        %290 = vperm.xlu0 %289, %v272
        %v291 = vpop.permute.xlu0 %290
        %v293 = vadd.f32 %v265, %v276
        %v294 = vadd.f32 %v266, %v281
        %v295 = vadd.f32 %v267, %v286
        %v296 = vadd.f32 %v268, %v291
        %297 = vst [vmem:[%s185] sm:$0xff] %v293
        %298 = vst [vmem:[%s185 + $0x8] sm:$0xff] %v294
        %299 = vst [vmem:[%s185 + $0x10] sm:$0xff] %v295
        %300 = vst [vmem:[%s185 + $0x18] sm:$0xff] %v296
        %s301 = sand.u32 %s109, 1
        %s302 = scalar_lea.sflag [#allocation3], %s301
        %s303 = sand.u32 %s109, 1
        %s304 = smul.addr %s303, 32
        %s305 = scalar_lea.vmem [#allocation2], %s304
        // Predicated region
        $region33: #{tpu_custom_call.1} parent=31 // pred_check
          %p306 = pneg %p119
        $region34: #{tpu_custom_call.1} parent=31 // pred_check_branch
          %308 = sbr.rel (%p306) target = $region36
        $region35: #{tpu_custom_call.1} parent=31 // pred_region
          %s310 = ssub.s32 512, 512
          %311 = vsyncadd %s302, %s310
          %s312 = smul.addr %s21, 4
          %s313 = sadd.s32 %s22, %s312
          %s314 = smul.addr %s313, 128
          %s315 = scalar_lea.hbm %s3, %s314
          %s316 = sshll.u32 %s305, 4
          %s317 = int_to_ptr.vmem [resolvable:$true] %s316
          %322 = dma.vmem_to_hbm [thread:$0]  %s317, 512, %s315, %s302, 128, 128, 8
        $region36: #{tpu_custom_call.1} parent=31 // pred_fallthru
          _
      $region32: #{tpu_custom_call.1} parent=5 // pred_fallthru
        _
      %p323 = scmp.le.s32.totalorder 2, %s12
      // Predicated region
      $region37: #{tpu_custom_call.1} parent=5 // pred_check
        %p324 = pneg %p323
      $region38: #{tpu_custom_call.1} parent=5 // pred_check_branch
        %326 = sbr.rel (%p324) target = $region40
      $region39: #{tpu_custom_call.1} parent=5 // pred_region
        %s327 = ssub.s32 %s12, 2
        // Predicated region
        $region41: #{tpu_custom_call.1} parent=39 // pred_check
          %p328 = pneg %p125
        $region42: #{tpu_custom_call.1} parent=39 // pred_check_branch
          %330 = sbr.rel (%p328) target = $region44
        $region43: #{tpu_custom_call.1} parent=39 // pred_region
          %s331 = sand.u32 %s110, 1
          %s332 = scalar_lea.sflag [#allocation3], %s331
          %s333 = sand.u32 %s110, 1
          %s334 = smul.addr %s333, 32
          %s335 = scalar_lea.vmem [#allocation2], %s334
          %336 = dma.done %s332, 512
        $region44: #{tpu_custom_call.1} parent=39 // pred_fallthru
          _
      $region40: #{tpu_custom_call.1} parent=5 // pred_fallthru
        _
    $region6: #{tpu_custom_call.1} parent=1 // loop_footer
      %s16 = sadd.s32 1, %s12
    $region7: #{tpu_custom_call.1} parent=1 // loop_footer_branch
      %11 = sbr.rel target = $region3
    $region8: #{tpu_custom_call.1} parent=1 // loop_exit
      _
    %337 = vsyncpa [#allocation3], 1
    %s338 = scalar_lea.sflag [#allocation3], 1
    %339 = vsyncpa %s338, 1

</llo_original>
